<compile_context>
chip_gen: v6e
topology: v6e:2x2x1
jax: 0.10.0
libtpu: 0.0.40
codegen_flags: <defaults>
</compile_context>

<pallas_src>
import functools

import jax
import jax.numpy as jnp
from jax.experimental import pallas as pl
from jax.experimental.pallas import tpu as pltpu

LANE = 128     # TPU vreg lane width
SUBLANE = 8    # f32/int32 sublane granularity


def _round_up(x: int, m: int) -> int:
    return ((x + m - 1) // m) * m


# --------------------------------------------------------------------------------------
# Fused kernel:  pred = before @ W_eff + B_eff[action]
# (exact collapse of the 2-layer affine stack at activation='none', use_bn=False, dropout=0)
# --------------------------------------------------------------------------------------
def _affine_vect_kernel(x_ref, act_ref, w_ref, beff_ref, out_ref, *, nr_actions):
    # single MXU pass: bf16 operands, f32 accumulation
    y = jnp.dot(x_ref[...].astype(w_ref.dtype), w_ref[...],
                preferred_element_type=jnp.float32)                  # [TB, Dp] f32

    # per-action bias gather: A-way compare/select against the exact f32 bias table.
    # out-of-range action ids (>= nr_actions) select no row -> zero action contribution
    # (same behaviour as the previous zero-padded one-hot formulation).
    act = act_ref[...]                                               # [TB, 1] int32
    table = beff_ref[...]                                            # [A_pad, Dp] f32
    bias = jnp.zeros_like(y)
    for a in range(nr_actions):          # static tiny loop (nr_actions == 4 here)
        bias = jnp.where(act == a, table[a:a + 1, :], bias)
    # TODO(synk): for large nr_actions replace the select loop with a one-hot matmul gather.

    out_ref[...] = (y + bias).astype(out_ref.dtype)


@functools.partial(jax.jit, static_argnames=("nr_actions", "d_out", "block_b"))
def fcn_vect_pred(before, action, w_eff, b_eff, *, nr_actions, d_out, block_b=512):
    """before: [B, V] f32; action: [B] int; w_eff: [V, Dp] bf16; b_eff: [A_pad, Dp] f32."""
    B, V = before.shape
    d_out_pad = w_eff.shape[1]
    a_pad = b_eff.shape[0]

    # batch tile: multiple of 8, <= block_b, ~ceil(B/2) so the grid has >=2 steps when
    # B > 8 and v7x can shard the 'parallel' batch axis across its 2 TensorCores.
    # (block_b is sweepable for very large B; per-tile VMEM stays tiny either way.)
    tb = max(SUBLANE, min(block_b, _round_up(pl.cdiv(B, 2), SUBLANE)))
    grid = (pl.cdiv(B, tb),)
    action2d = action.astype(jnp.int32).reshape(B, 1)

    kernel = functools.partial(_affine_vect_kernel, nr_actions=nr_actions)
    out_padded = pl.pallas_call(
        kernel,
        out_shape=jax.ShapeDtypeStruct((B, d_out_pad), before.dtype),
        grid_spec=pltpu.PrefetchScalarGridSpec(
            num_scalar_prefetch=0,
            grid=grid,
            in_specs=[
                pl.BlockSpec((tb, V), lambda i: (i, 0)),              # before tile
                pl.BlockSpec((tb, 1), lambda i: (i, 0)),              # action ids tile
                pl.BlockSpec((V, d_out_pad), lambda i: (0, 0)),       # W_eff (VMEM-resident)
                pl.BlockSpec((a_pad, d_out_pad), lambda i: (0, 0)),   # B_eff table (VMEM-resident)
            ],
            out_specs=pl.BlockSpec((tb, d_out_pad), lambda i: (i, 0)),  # lane-dense store
        ),
        compiler_params=pltpu.CompilerParams(
            dimension_semantics=("parallel",),   # batch axis: shardable across v7x's 2 TCs
        ),
    )(before, action2d, w_eff, b_eff)

    return out_padded[:, :d_out]   # drop zero lane padding inside the same jit


# --------------------------------------------------------------------------------------
# Module-equivalent wrapper (parameter setup + glue in plain JAX)
# --------------------------------------------------------------------------------------
class ConditionalFCNVecTPallas:
    """JAX/Pallas equivalent of ConditionalFCNVecT('concat', activation='none',
    dropout_p=0.0, use_bn=False, hidden_sizes=None) in eval mode."""

    def __init__(self, nr_actions: int, vec_size: int, key, *, activation="none",
                 use_bn=False, dropout_p=0.0, hidden_sizes=None, conditioning_method="concat"):
        # The affine collapse is only valid at the module defaults — gate on them.
        assert activation == "none" and not use_bn and dropout_p == 0.0
        assert hidden_sizes is None and conditioning_method == "concat"
        # TODO(synk): non-'none' activation / BN / dropout need the un-collapsed 2-matmul kernel.

        self.nr_actions = nr_actions
        self.vec_size = vec_size

        # layer-size derivation identical to the PyTorch module
        d_in = vec_size + nr_actions
        self.hidden = int(d_in * 0.75)
        d_out = vec_size
        self.d_out = d_out
        self.d_out_pad = _round_up(d_out, LANE)     # lane-dense output
        self.a_pad = _round_up(nr_actions, SUBLANE)  # sublane-pad bias table only

        k1, k2, k3, k4 = jax.random.split(key, 4)
        # f32 "master" params, stored [in, out] (transposed w.r.t. torch.nn.Linear.weight)
        w1 = jax.random.normal(k1, (d_in, self.hidden), jnp.float32) * 0.05
        b1 = jax.random.normal(k2, (1, self.hidden), jnp.float32) * 0.05
        w2 = jax.random.normal(k3, (self.hidden, d_out), jnp.float32) * 0.05
        b2 = jax.random.normal(k4, (1, d_out), jnp.float32) * 0.05
        self._w1, self._b1, self._w2, self._b2 = w1, b1, w2, b2

        # exact affine collapse (f32), then zero-pad to lane-dense output width
        w_eff = w1[:vec_size] @ w2                                # [V, d_out]
        b_eff = w1[vec_size:] @ w2 + b1 @ w2 + b2                 # [A, d_out] per-action rows

        w_eff_p = jnp.zeros((vec_size, self.d_out_pad), jnp.float32).at[:, :d_out].set(w_eff)
        b_eff_p = jnp.zeros((self.a_pad, self.d_out_pad), jnp.float32).at[:nr_actions, :d_out].set(b_eff)

        self.w_eff = w_eff_p.astype(jnp.bfloat16)   # MXU operand
        self.b_eff = b_eff_p                        # exact f32 bias table

    # ----- forward ------------------------------------------------------------------
    def forward(self, before, action, after=None, negatives=None):
        # embed_visual is nn.Identity() for 'concat'; after/negatives pass through unchanged
        pred = fcn_vect_pred(before, action, self.w_eff, self.b_eff,
                             nr_actions=self.nr_actions, d_out=self.d_out)
        return before, pred, after, negatives

    __call__ = forward

    # ----- references ----------------------------------------------------------------
    def reference_pred_kernel_math(self, before, action):
        """Same collapsed bf16-operand / f32-bias math as the kernel (strict check)."""
        y = jnp.dot(before.astype(jnp.bfloat16), self.w_eff,
                    preferred_element_type=jnp.float32)
        bias = self.b_eff[action.astype(jnp.int32)]
        return (y + bias)[:, :self.d_out].astype(before.dtype)

    def reference_pred_f32(self, before, action):
        """Original module math (concat formulation) in f32 — quantization sanity check."""
        onehot = jax.nn.one_hot(action, self.nr_actions, dtype=jnp.float32)
        x = jnp.concatenate([before, onehot], axis=-1)
        h = x @ self._w1 + self._b1
        return h @ self._w2 + self._b2


if __name__ == "__main__":
    key = jax.random.PRNGKey(0)
    k_param, k_before, k_action, k_after, k_neg = jax.random.split(key, 5)

    batch, vec_size, nr_actions, n_neg = 8, 32, 4, 3
    # NOTE: at B=8 the call is launch-latency bound regardless of in-kernel tuning;
    # production callers should stack timesteps/batches before hitting this kernel.

    model = ConditionalFCNVecTPallas(nr_actions, vec_size, k_param)

    before = jax.random.normal(k_before, (batch, vec_size), jnp.float32)
    action = jax.random.randint(k_action, (batch,), 0, nr_actions)
    after = jax.random.normal(k_after, (batch, vec_size), jnp.float32)
    negatives = jax.random.normal(k_neg, (batch, n_neg, vec_size), jnp.float32)

    out_before, pred, out_after, out_neg = model(before, action, after, negatives)
    pred = jax.block_until_ready(pred)

    assert pred.shape == (batch, vec_size)
    assert pred.dtype == before.dtype

    # strict check: identical collapsed bf16/f32 math as the kernel
    ref_kernel = model.reference_pred_kernel_math(before, action)
    assert jnp.allclose(pred, ref_kernel, atol=1e-4, rtol=1e-4), "kernel mismatch vs collapsed reference"

    # sanity check vs the original f32 module math (difference is bf16 W_eff/x quant only)
    ref_f32 = model.reference_pred_f32(before, action)
    assert jnp.allclose(pred, ref_f32, atol=3e-2, rtol=3e-2), "kernel drifted vs f32 module math"

    # passthrough outputs are identities, as in the PyTorch module
    assert out_before is before and out_after is after and out_neg is negatives

    print("KERNEL_OK")
</pallas_src>

<mosaic_0001>
module attributes {stable_mosaic.version = 11 : i64} {
  func.func @_affine_vect_kernel(%arg0: i32, %arg1: memref<8x32xf32, #tpu.memory_space<vmem>>, %arg2: memref<8x1xi32, #tpu.memory_space<vmem>>, %arg3: memref<32x128xbf16, #tpu.memory_space<vmem>>, %arg4: memref<8x128xf32, #tpu.memory_space<vmem>>, %arg5: memref<8x128xf32, #tpu.memory_space<vmem>>) attributes {dimension_semantics = [#tpu.dimension_semantics<parallel>], iteration_bounds = array<i64: 1>, scalar_prefetch = 0 : i64, scratch_operands = 0 : i64, tpu.core_type = #tpu.core_type<tc>, window_params = [{transform_indices = @transform_0, window_bounds = array<i64: 8, 32>}, {transform_indices = @transform_1, window_bounds = array<i64: 8, 1>}, {pipeline_mode = #tpu.pipeline_mode<synchronous>, transform_indices = @transform_2, window_bounds = array<i64: 32, 128>}, {pipeline_mode = #tpu.pipeline_mode<synchronous>, transform_indices = @transform_3, window_bounds = array<i64: 8, 128>}, {transform_indices = @transform_4, window_bounds = array<i64: 8, 128>}]} {
    %c0 = arith.constant 0 : index
    %c0_0 = arith.constant 0 : index
    %0 = vector.load %arg1[%c0, %c0_0] : memref<8x32xf32, #tpu.memory_space<vmem>>, vector<8x32xf32>
    %1 = arith.truncf %0 : vector<8x32xf32> to vector<8x32xbf16>
    %c0_1 = arith.constant 0 : index
    %c0_2 = arith.constant 0 : index
    %2 = vector.load %arg3[%c0_1, %c0_2] : memref<32x128xbf16, #tpu.memory_space<vmem>>, vector<32x128xbf16>
    %cst = arith.constant dense<0.000000e+00> : vector<8x128xf32>
    %3 = tpu.matmul %1, %2, %cst {dimension_numbers = #tpu.dot_dimension_numbers<[1], [0], [0], [1], [0, 0, 1, 1], [], []>} : vector<8x32xbf16>, vector<32x128xbf16>, vector<8x128xf32> -> vector<8x128xf32>
    %c0_3 = arith.constant 0 : index
    %c0_4 = arith.constant 0 : index
    %4 = vector.load %arg2[%c0_3, %c0_4] : memref<8x1xi32, #tpu.memory_space<vmem>>, vector<8x1xi32>
    %c0_5 = arith.constant 0 : index
    %c0_6 = arith.constant 0 : index
    %5 = vector.load %arg4[%c0_5, %c0_6] : memref<8x128xf32, #tpu.memory_space<vmem>>, vector<8x128xf32>
    %cst_7 = arith.constant 0.000000e+00 : f32
    %6 = vector.broadcast %cst_7 : f32 to vector<8x128xf32>
    %c0_i32 = arith.constant 0 : i32
    %7 = vector.broadcast %c0_i32 : i32 to vector<8x1xi32>
    %8 = arith.cmpi eq, %4, %7 : vector<8x1xi32>
    %9 = vector.extract_strided_slice %5 {offsets = [0, 0], sizes = [1, 128], strides = [1, 1]} : vector<8x128xf32> to vector<1x128xf32>
    %10 = vector.shape_cast %8 : vector<8x1xi1> to vector<8x1xi1>
    %11 = vector.broadcast %10 : vector<8x1xi1> to vector<8x128xi1>
    %12 = vector.shape_cast %9 : vector<1x128xf32> to vector<1x128xf32>
    %13 = vector.broadcast %12 : vector<1x128xf32> to vector<8x128xf32>
    %14 = arith.select %11, %13, %6 : vector<8x128xi1>, vector<8x128xf32>
    %c1_i32 = arith.constant 1 : i32
    %15 = vector.broadcast %c1_i32 : i32 to vector<8x1xi32>
    %16 = arith.cmpi eq, %4, %15 : vector<8x1xi32>
    %17 = vector.extract_strided_slice %5 {offsets = [1, 0], sizes = [1, 128], strides = [1, 1]} : vector<8x128xf32> to vector<1x128xf32>
    %18 = vector.shape_cast %16 : vector<8x1xi1> to vector<8x1xi1>
    %19 = vector.broadcast %18 : vector<8x1xi1> to vector<8x128xi1>
    %20 = vector.shape_cast %17 : vector<1x128xf32> to vector<1x128xf32>
    %21 = vector.broadcast %20 : vector<1x128xf32> to vector<8x128xf32>
    %22 = arith.select %19, %21, %14 : vector<8x128xi1>, vector<8x128xf32>
    %c2_i32 = arith.constant 2 : i32
    %23 = vector.broadcast %c2_i32 : i32 to vector<8x1xi32>
    %24 = arith.cmpi eq, %4, %23 : vector<8x1xi32>
    %25 = vector.extract_strided_slice %5 {offsets = [2, 0], sizes = [1, 128], strides = [1, 1]} : vector<8x128xf32> to vector<1x128xf32>
    %26 = vector.shape_cast %24 : vector<8x1xi1> to vector<8x1xi1>
    %27 = vector.broadcast %26 : vector<8x1xi1> to vector<8x128xi1>
    %28 = vector.shape_cast %25 : vector<1x128xf32> to vector<1x128xf32>
    %29 = vector.broadcast %28 : vector<1x128xf32> to vector<8x128xf32>
    %30 = arith.select %27, %29, %22 : vector<8x128xi1>, vector<8x128xf32>
    %c3_i32 = arith.constant 3 : i32
    %31 = vector.broadcast %c3_i32 : i32 to vector<8x1xi32>
    %32 = arith.cmpi eq, %4, %31 : vector<8x1xi32>
    %33 = vector.extract_strided_slice %5 {offsets = [3, 0], sizes = [1, 128], strides = [1, 1]} : vector<8x128xf32> to vector<1x128xf32>
    %34 = vector.shape_cast %32 : vector<8x1xi1> to vector<8x1xi1>
    %35 = vector.broadcast %34 : vector<8x1xi1> to vector<8x128xi1>
    %36 = vector.shape_cast %33 : vector<1x128xf32> to vector<1x128xf32>
    %37 = vector.broadcast %36 : vector<1x128xf32> to vector<8x128xf32>
    %38 = arith.select %35, %37, %30 : vector<8x128xi1>, vector<8x128xf32>
    %39 = arith.addf %3, %38 : vector<8x128xf32>
    %c0_8 = arith.constant 0 : index
    %c0_9 = arith.constant 0 : index
    %40 = vector.load %arg5[%c0_8, %c0_9] : memref<8x128xf32, #tpu.memory_space<vmem>>, vector<8x128xf32>
    tpu.vector_store %arg5[%c0_8, %c0_9], %39 {strides = array<i32>} : memref<8x128xf32, #tpu.memory_space<vmem>>, vector<8x128xf32>,
    return
  }
  func.func @transform_0(%arg0: i32) -> (i32, i32) {
    %c0_i32 = arith.constant 0 : i32
    %c0_i32_0 = arith.constant 0 : i32
    return %arg0, %c0_i32 : i32, i32
  }
  func.func @transform_1(%arg0: i32) -> (i32, i32) {
    %c0_i32 = arith.constant 0 : i32
    %c0_i32_0 = arith.constant 0 : i32
    return %arg0, %c0_i32 : i32, i32
  }
  func.func @transform_2(%arg0: i32) -> (i32, i32) {
    %c0_i32 = arith.constant 0 : i32
    %c0_i32_0 = arith.constant 0 : i32
    %c0_i32_1 = arith.constant 0 : i32
    return %c0_i32, %c0_i32_0 : i32, i32
  }
  func.func @transform_3(%arg0: i32) -> (i32, i32) {
    %c0_i32 = arith.constant 0 : i32
    %c0_i32_0 = arith.constant 0 : i32
    %c0_i32_1 = arith.constant 0 : i32
    return %c0_i32, %c0_i32_0 : i32, i32
  }
  func.func @transform_4(%arg0: i32) -> (i32, i32) {
    %c0_i32 = arith.constant 0 : i32
    %c0_i32_0 = arith.constant 0 : i32
    return %arg0, %c0_i32 : i32, i32
  }
}

</mosaic_0001>

<llo_original>
// kernel: fcn_vect_pred.1
$region0: #{fcn_vect_pred.1}
  #allocation0 [shape = 'u32[]', space=smem, size = 0x4, offset = 0x4, fixed_abs, tag = 'smem constant byte address 0x4 - core index']
  #allocation1 [shape = 'u32[144,128]{1,0:T(1,128)}', space=vmem, size = 0x12000, scoped, tag = 'internal scratch']
  %s0 = inlined_call_operand.vmem [shape: f32[8,32], index: 0, kind: input, shape index: {}]
  %s1 = inlined_call_operand.vmem [shape: s32[8,1], index: 1, kind: input, shape index: {}]
  %s2 = inlined_call_operand.hbm [shape: bf16[32,128], index: 2, kind: input, shape index: {}]
  %s3 = inlined_call_operand.vmem [shape: f32[8,128], index: 3, kind: input, shape index: {}]
  %s4 = inlined_call_operand.hbm [shape: f32[8,128], index: 4, kind: output, shape index: {}]
  %s5 = sld [smem:[#allocation0]]
  $region30: #{fcn_vect_pred.1} parent=0
    _
  %s7 = ssub.s32 1, %s5
  %s8 = scalar_select 0, %s7, %s5
  $region1: #{fcn_vect_pred.1} parent=0
    #allocation2 [shape = 'u8[8192]{0}', space=vmem, size = 0x2000, scoped, tag = 'input window, operand 2, single buffered']
    #allocation3 [shape = 's32[1]{0}', space=sflag, size = 0x4, scoped, tag = 'scoped memory for fcn_vect_pred.1']
    #allocation4 [shape = 's32[1]{0}', space=sflag, size = 0x4, scoped, tag = 'scoped memory for fcn_vect_pred.1']
    #allocation5 [shape = 'u8[4096]{0}', space=vmem, size = 0x1000, scoped, tag = 'output window, operand 0, single buffered']
    %9 = vsyncpa [#allocation3], 0
    %10 = vsyncpa [#allocation4], 0
    // Predicated region
    $region2: #{fcn_vect_pred.1} parent=1 // pred_check
      _
    $region3: #{fcn_vect_pred.1} parent=1 // pred_check_branch
      %12 = sbr.rel (0) target = $region5
    $region4: #{fcn_vect_pred.1} parent=1 // pred_region
      _
    $region5: #{fcn_vect_pred.1} parent=1 // pred_fallthru
      _
    // Predicated region
    $region6: #{fcn_vect_pred.1} parent=1 // pred_check
      _
    $region7: #{fcn_vect_pred.1} parent=1 // pred_check_branch
      %14 = sbr.rel (0) target = $region9
    $region8: #{fcn_vect_pred.1} parent=1 // pred_region
      _
    $region9: #{fcn_vect_pred.1} parent=1 // pred_fallthru
      _
    // Predicated region
    $region10: #{fcn_vect_pred.1} parent=1 // pred_check
      _
    $region11: #{fcn_vect_pred.1} parent=1 // pred_check_branch
      %16 = sbr.rel (0) target = $region13
    $region12: #{fcn_vect_pred.1} parent=1 // pred_region
      %s18 = ssub.s32 256, 256
      %19 = vsyncadd [#allocation3], %s18
      %s20 = sshll.u32 [#allocation2], 4
      %s21 = int_to_ptr.vmem [resolvable:$true] %s20
      %26 = dma.hbm_to_vmem [thread:$0]  %s2, 256, %s21, [#allocation3], 64, 64, 4
    $region13: #{fcn_vect_pred.1} parent=1 // pred_fallthru
      _
    // Predicated region
    $region14: #{fcn_vect_pred.1} parent=1 // pred_check
      _
    $region15: #{fcn_vect_pred.1} parent=1 // pred_check_branch
      %28 = sbr.rel (0) target = $region17
    $region16: #{fcn_vect_pred.1} parent=1 // pred_region
      _
    $region17: #{fcn_vect_pred.1} parent=1 // pred_fallthru
      _
    // Predicated region
    $region18: #{fcn_vect_pred.1} parent=1 // pred_check
      _
    $region19: #{fcn_vect_pred.1} parent=1 // pred_check_branch
      %30 = sbr.rel (0) target = $region21
    $region20: #{fcn_vect_pred.1} parent=1 // pred_region
      %31 = dma.done [#allocation3], 256
    $region21: #{fcn_vect_pred.1} parent=1 // pred_fallthru
      _
    %v33 = vld [vmem:[%s0] sm:$0xff]
    %v34 = vpack.c.bf16 %v33, %v33
    %v35 = vld [vmem:[#allocation2] sm:$0xf]
    %v36 = vld [vmem:[#allocation2 + $0x4] sm:$0xf]
    %v37 = vld [vmem:[#allocation2 + $0x8] sm:$0xf]
    %v38 = vld [vmem:[#allocation2 + $0xc] sm:$0xf]
    %v39 = vld [vmem:[%s1] sm:$0xff]
    %v40 = vld [vmem:[%s3] sm:$0xff]
    %vm41 = vcmp.eq.s32.totalorder %v39, 0
    %v42 = vsel %vm41, 1, 0
    %43 = vset.pattern.permute.xlu0 0
    %44 = vperm.xlu0 %43, %v42
    %v45 = vpop.permute.xlu0 %44
    %vm46 = vcmp.eq.s32.totalorder %v45, 1
    %v47 = vlaneseq
    %v48 = vshrl.u32 %v47, 7
    %v49 = vsub.s32 0, %v48
    %v50 = vrot.slane %v40, %v49
    %v51 = vsel %vm46, %v50, 0.0
    %vm52 = vcmp.eq.s32.totalorder %v39, 1
    %v53 = vsel %vm52, 1, 0
    %54 = vset.pattern.permute.xlu0 0
    %55 = vperm.xlu0 %54, %v53
    %v56 = vpop.permute.xlu0 %55
    %vm57 = vcmp.eq.s32.totalorder %v56, 1
    %v58 = vlaneseq
    %v59 = vshrl.u32 %v58, 7
    %v60 = vsub.s32 1, %v59
    %v61 = vrot.slane %v40, %v60
    %v62 = vsel %vm57, %v61, %v51
    %vm63 = vcmp.eq.s32.totalorder %v39, 2
    %v64 = vsel %vm63, 1, 0
    %65 = vset.pattern.permute.xlu0 0
    %66 = vperm.xlu0 %65, %v64
    %v67 = vpop.permute.xlu0 %66
    %vm68 = vcmp.eq.s32.totalorder %v67, 1
    %v69 = vlaneseq
    %v70 = vshrl.u32 %v69, 7
    %v71 = vsub.s32 2, %v70
    %v72 = vrot.slane %v40, %v71
    %v73 = vsel %vm68, %v72, %v62
    %vm74 = vcmp.eq.s32.totalorder %v39, 3
    %v75 = vsel %vm74, 1, 0
    %76 = vset.pattern.permute.xlu0 0
    %77 = vperm.xlu0 %76, %v75
    %v78 = vpop.permute.xlu0 %77
    %vm79 = vcmp.eq.s32.totalorder %v78, 1
    %v80 = vlaneseq
    %v81 = vshrl.u32 %v80, 7
    %v82 = vsub.s32 3, %v81
    %v83 = vrot.slane %v40, %v82
    %v84 = vsel %vm79, %v83, %v73
    %v89 = vunpack.c.l.b16 %v35
    %v90 = vunpack.c.l.b16 %v36
    %v91 = vunpack.c.l.b16 %v37
    %v92 = vunpack.c.l.b16 %v38
    %v93 = vpack.c.b16 %v90, %v89
    %v94 = vpack.c.b16 %v92, %v91
    %vm97 = vcmask 261120
    %v99 = vsel %vm97, %v34, 0
    %101 = vmatprep.subr.bf16.mxu0 0
    %102 = vmatpush1.bf16.msra.mxu0 0
    %103 = vmatprep.subr.bf16.mxu0 0
    %104 = vmatpush1.bf16.msra.mxu0 0
    %105 = vmatprep.subr.bf16.mxu0 0
    %106 = vmatpush1.bf16.msra.mxu0 0
    %107 = vmatprep.subr.bf16.mxu0 0
    %108 = vmatpush1.bf16.msra.mxu0 0
    %109 = vmatprep.subr.bf16.mxu0 0
    %110 = vmatpush1.bf16.msra.mxu0 0
    %111 = vmatprep.subr.bf16.mxu0 0
    %112 = vmatpush1.bf16.msra.mxu0 0
    %113 = vmatprep.subr.bf16.mxu0 0
    %114 = vmatpush1.bf16.msra.mxu0 %v94
    %115 = vmatprep.subr.bf16.mxu0 0
    %116 = vmatpush1.bf16.msra.mxu0 %v93
    %117 = vmatprep.subr.bf16.mxu0 0
    %118 = vmatpush2.bf16.msra.mxu0 0
    %119 = vmatprep.subr.bf16.mxu0 0
    %120 = vmatpush2.bf16.msra.mxu0 0
    %121 = vmatprep.subr.bf16.mxu0 0
    %122 = vmatpush2.bf16.msra.mxu0 0
    %123 = vmatprep.subr.bf16.mxu0 0
    %124 = vmatpush2.bf16.msra.mxu0 0
    %125 = vmatprep.subr.bf16.mxu0 0
    %126 = vmatpush2.bf16.msra.mxu0 0
    %127 = vmatprep.subr.bf16.mxu0 0
    %128 = vmatpush2.bf16.msra.mxu0 0
    %129 = vmatprep.subr.bf16.mxu0 0
    %130 = vmatpush2.bf16.msra.mxu0 0
    %131 = vmatprep.subr.bf16.mxu0 0
    %132 = vmatpush2.bf16.msra.mxu0 0
    %133 = vmatprep.mubr.bf16.mxu0 0
    %134 = vmatmul.mubr.bf16.gmra.mxu0 %v99
    %v135 = vpop.f32.mrf.mxu0
    %v136 = vadd.f32 %v84, %v135
    %v137 = vpop.f32.mrf.mxu0
    %v138 = vpop.f32.mrf.mxu0
    %v139 = vpop.f32.mrf.mxu0
    %140 = vdwg.mxu0
    %141 = vst [vmem:[#allocation5] sm:$0xff] %v136
    // Predicated region
    $region22: #{fcn_vect_pred.1} parent=1 // pred_check
      _
    $region23: #{fcn_vect_pred.1} parent=1 // pred_check_branch
      %143 = sbr.rel (0) target = $region25
    $region24: #{fcn_vect_pred.1} parent=1 // pred_region
      %s145 = ssub.s32 128, 128
      %146 = vsyncadd [#allocation4], %s145
      %s148 = sshll.u32 [#allocation5], 4
      %s149 = int_to_ptr.vmem [resolvable:$true] %s148
      %151 = dma.vmem_to_hbm [thread:$0]  %s149, 128, %s4, [#allocation4]
    $region25: #{fcn_vect_pred.1} parent=1 // pred_fallthru
      _
    // Predicated region
    $region26: #{fcn_vect_pred.1} parent=1 // pred_check
      _
    $region27: #{fcn_vect_pred.1} parent=1 // pred_check_branch
      %153 = sbr.rel (0) target = $region29
    $region28: #{fcn_vect_pred.1} parent=1 // pred_region
      %154 = dma.done [#allocation4], 128
    $region29: #{fcn_vect_pred.1} parent=1 // pred_fallthru
      _
    %155 = vsyncpa [#allocation3], 1
    %156 = vsyncpa [#allocation4], 1

</llo_original>
